<compile_context>
chip_gen: v5e
topology: v5e:2x2
jax: 0.10.0
libtpu: 0.0.40
codegen_flags: <defaults>
</compile_context>

<pallas_src>
import jax
import jax.numpy as jnp
from jax.experimental import pallas as pl
from jax.experimental.pallas import tpu as pltpu


def _time_embedding_kernel(x_ref, w1_ref, b1_ref, w2_ref, b2_ref, o_ref):
    # x / W1 / b1 have constant index_maps -> resident in VMEM across all
    # N-tiles (DMA'd once). Recompute h per tile: B=1 makes this a trivial
    # amount of MXU work that hides under the W2 tile DMA, and it keeps the
    # "parallel" N axis correct if the grid is split across TensorCores.
    h = jnp.dot(x_ref[...].astype(w1_ref.dtype), w1_ref[...],
                preferred_element_type=jnp.float32)
    h = h + b1_ref[...].astype(jnp.float32)
    # SiLU (Swish) in f32: sigmoid lowers to the EUP (free slot); f32 avoids
    # the v5e bf16 VPU/EUP gap.
    h = h * jax.nn.sigmoid(h)

    # Second linear, one N-tile: (B, hidden) @ (hidden, TN) + (1, TN)
    y = jnp.dot(h.astype(w2_ref.dtype), w2_ref[...],
                preferred_element_type=jnp.float32)
    y = y + b2_ref[...].astype(jnp.float32)
    o_ref[...] = y.astype(o_ref.dtype)


def _pick_tile_n(hidden, dtype_bytes):
    """Pick an N tile for W2: lane-dense, MXU-friendly, VMEM-bounded."""
    # Cap so double-buffered W2 tiles (2 * hidden * TN * bytes) stay well under
    # the smallest scoped-VMEM default (32 MiB on v6e/v7x), leaving headroom
    # for resident x/W1/b1 and the output tiles.
    budget = 8 * 1024 * 1024  # bytes for ONE W2 tile buffer
    candidates = (2048, 1024, 512, 256, 128)
    for tn in candidates:
        if hidden % tn == 0 and hidden * tn * dtype_bytes <= budget:
            # Prefer multiples of 256 for v6e/v7x's 256-wide MXU when possible.
            if tn % 256 == 0 or hidden % 256 != 0 or tn == 128:
                return tn
    # Fallback: full block (block_shape == array dim, so no (8,128) constraint).
    return hidden


def time_embedding(x, w1, b1, w2, b2):
    """Pallas TimeEmbedding forward.

    x:  (B, n_embd)
    w1: (n_embd, 4*n_embd)   b1: (1, 4*n_embd)
    w2: (4*n_embd, 4*n_embd) b2: (1, 4*n_embd)
    returns (B, 4*n_embd)

    Weights may be bfloat16 to halve HBM traffic; accumulation is f32.
    """
    B, n_embd = x.shape
    hidden = 4 * n_embd
    assert w1.shape == (n_embd, hidden), w1.shape
    assert b1.shape == (1, hidden), b1.shape
    assert w2.shape == (hidden, hidden), w2.shape
    assert b2.shape == (1, hidden), b2.shape

    tn = _pick_tile_n(hidden, jnp.dtype(w2.dtype).itemsize)
    grid_n = hidden // tn

    return pl.pallas_call(
        _time_embedding_kernel,
        out_shape=jax.ShapeDtypeStruct((B, hidden), x.dtype),
        grid_spec=pltpu.PrefetchScalarGridSpec(
            num_scalar_prefetch=0,
            grid=(grid_n,),
            in_specs=[
                # Resident across all N-tiles (constant block index).
                pl.BlockSpec((B, n_embd), lambda j: (0, 0)),
                pl.BlockSpec((n_embd, hidden), lambda j: (0, 0)),
                pl.BlockSpec((1, hidden), lambda j: (0, 0)),
                # Streamed / pipelined along N.
                pl.BlockSpec((hidden, tn), lambda j: (0, j)),
                pl.BlockSpec((1, tn), lambda j: (0, j)),
            ],
            out_specs=pl.BlockSpec((B, tn), lambda j: (0, j)),
        ),
        compiler_params=pltpu.CompilerParams(
            # Independent output-column tiles: lets v7x's 2 TensorCores split
            # the W2 stream; neutral on single-TC v5e/v6e.
            dimension_semantics=("parallel",)),
    )(x, w1, b1, w2, b2)


def time_embedding_ref(x, w1, b1, w2, b2):
    h = x @ w1.astype(x.dtype) + b1.astype(x.dtype)
    h = h * jax.nn.sigmoid(h)
    return h @ w2.astype(x.dtype) + b2.astype(x.dtype)


if __name__ == "__main__":
    n_embd = 32          # small synthetic size; hidden = 4 * n_embd = 128
    hidden = 4 * n_embd
    B = 1                # module forward takes (1, n_embd)

    key = jax.random.PRNGKey(0)
    kx, kw1, kb1, kw2, kb2 = jax.random.split(key, 5)

    x = jax.random.normal(kx, (B, n_embd), dtype=jnp.float32)
    # PyTorch-Linear-shaped params, stored pre-transposed as (in, out).
    # (Pass bf16 weights here to halve HBM weight traffic at real sizes.)
    w1 = jax.random.normal(kw1, (n_embd, hidden), dtype=jnp.float32) * 0.05
    b1 = jax.random.normal(kb1, (1, hidden), dtype=jnp.float32) * 0.05
    w2 = jax.random.normal(kw2, (hidden, hidden), dtype=jnp.float32) * 0.05
    b2 = jax.random.normal(kb2, (1, hidden), dtype=jnp.float32) * 0.05

    out = time_embedding(x, w1, b1, w2, b2)
    out = jax.block_until_ready(out)

    ref = time_embedding_ref(x, w1, b1, w2, b2)
    assert out.shape == (B, hidden), out.shape
    assert jnp.allclose(out, ref, atol=1e-5, rtol=1e-5), "mismatch vs reference"

    print("KERNEL_OK")
</pallas_src>

<mosaic_0001>
module attributes {stable_mosaic.version = 11 : i64} {
  func.func @_time_embedding_kernel(%arg0: i32, %arg1: memref<1x32xf32, #tpu.memory_space<vmem>>, %arg2: memref<32x128xf32, #tpu.memory_space<vmem>>, %arg3: memref<1x128xf32, #tpu.memory_space<vmem>>, %arg4: memref<128x128xf32, #tpu.memory_space<vmem>>, %arg5: memref<1x128xf32, #tpu.memory_space<vmem>>, %arg6: memref<1x128xf32, #tpu.memory_space<vmem>>) attributes {dimension_semantics = [#tpu.dimension_semantics<parallel>], iteration_bounds = array<i64: 1>, scalar_prefetch = 0 : i64, scratch_operands = 0 : i64, tpu.core_type = #tpu.core_type<tc>, window_params = [{pipeline_mode = #tpu.pipeline_mode<synchronous>, transform_indices = @transform_0, window_bounds = array<i64: 1, 32>}, {pipeline_mode = #tpu.pipeline_mode<synchronous>, transform_indices = @transform_1, window_bounds = array<i64: 32, 128>}, {pipeline_mode = #tpu.pipeline_mode<synchronous>, transform_indices = @transform_2, window_bounds = array<i64: 1, 128>}, {transform_indices = @transform_3, window_bounds = array<i64: 128, 128>}, {transform_indices = @transform_4, window_bounds = array<i64: 1, 128>}, {transform_indices = @transform_5, window_bounds = array<i64: 1, 128>}]} {
    %c0 = arith.constant 0 : index
    %c0_0 = arith.constant 0 : index
    %0 = vector.load %arg1[%c0, %c0_0] : memref<1x32xf32, #tpu.memory_space<vmem>>, vector<1x32xf32>
    %c0_1 = arith.constant 0 : index
    %c0_2 = arith.constant 0 : index
    %1 = vector.load %arg2[%c0_1, %c0_2] : memref<32x128xf32, #tpu.memory_space<vmem>>, vector<32x128xf32>
    %cst = arith.constant dense<0.000000e+00> : vector<1x128xf32>
    %2 = tpu.matmul %0, %1, %cst {dimension_numbers = #tpu.dot_dimension_numbers<[1], [0], [0], [1], [0, 0, 1, 1], [], []>} : vector<1x32xf32>, vector<32x128xf32>, vector<1x128xf32> -> vector<1x128xf32>
    %c0_3 = arith.constant 0 : index
    %c0_4 = arith.constant 0 : index
    %3 = vector.load %arg3[%c0_3, %c0_4] : memref<1x128xf32, #tpu.memory_space<vmem>>, vector<1x128xf32>
    %4 = arith.addf %2, %3 : vector<1x128xf32>
    %5 = arith.negf %4 : vector<1x128xf32>
    %6 = math.exp %5 : vector<1x128xf32>
    %cst_5 = arith.constant 1.000000e+00 : f32
    %7 = vector.broadcast %cst_5 : f32 to vector<1x128xf32>
    %8 = arith.addf %7, %6 : vector<1x128xf32>
    %9 = arith.divf %7, %8 : vector<1x128xf32>
    %10 = arith.mulf %4, %9 : vector<1x128xf32>
    %c0_6 = arith.constant 0 : index
    %c0_7 = arith.constant 0 : index
    %11 = vector.load %arg4[%c0_6, %c0_7] : memref<128x128xf32, #tpu.memory_space<vmem>>, vector<128x128xf32>
    %cst_8 = arith.constant dense<0.000000e+00> : vector<1x128xf32>
    %12 = tpu.matmul %10, %11, %cst_8 {dimension_numbers = #tpu.dot_dimension_numbers<[1], [0], [0], [1], [0, 0, 1, 1], [], []>} : vector<1x128xf32>, vector<128x128xf32>, vector<1x128xf32> -> vector<1x128xf32>
    %c0_9 = arith.constant 0 : index
    %c0_10 = arith.constant 0 : index
    %13 = vector.load %arg5[%c0_9, %c0_10] : memref<1x128xf32, #tpu.memory_space<vmem>>, vector<1x128xf32>
    %14 = arith.addf %12, %13 : vector<1x128xf32>
    %c0_11 = arith.constant 0 : index
    %c0_12 = arith.constant 0 : index
    %15 = vector.load %arg6[%c0_11, %c0_12] : memref<1x128xf32, #tpu.memory_space<vmem>>, vector<1x128xf32>
    tpu.vector_store %arg6[%c0_11, %c0_12], %14 {strides = array<i32>} : memref<1x128xf32, #tpu.memory_space<vmem>>, vector<1x128xf32>,
    return
  }
  func.func @transform_0(%arg0: i32) -> (i32, i32) {
    %c0_i32 = arith.constant 0 : i32
    %c0_i32_0 = arith.constant 0 : i32
    %c0_i32_1 = arith.constant 0 : i32
    return %c0_i32, %c0_i32_0 : i32, i32
  }
  func.func @transform_1(%arg0: i32) -> (i32, i32) {
    %c0_i32 = arith.constant 0 : i32
    %c0_i32_0 = arith.constant 0 : i32
    %c0_i32_1 = arith.constant 0 : i32
    return %c0_i32, %c0_i32_0 : i32, i32
  }
  func.func @transform_2(%arg0: i32) -> (i32, i32) {
    %c0_i32 = arith.constant 0 : i32
    %c0_i32_0 = arith.constant 0 : i32
    %c0_i32_1 = arith.constant 0 : i32
    return %c0_i32, %c0_i32_0 : i32, i32
  }
  func.func @transform_3(%arg0: i32) -> (i32, i32) {
    %c0_i32 = arith.constant 0 : i32
    %c0_i32_0 = arith.constant 0 : i32
    return %c0_i32, %arg0 : i32, i32
  }
  func.func @transform_4(%arg0: i32) -> (i32, i32) {
    %c0_i32 = arith.constant 0 : i32
    %c0_i32_0 = arith.constant 0 : i32
    return %c0_i32, %arg0 : i32, i32
  }
  func.func @transform_5(%arg0: i32) -> (i32, i32) {
    %c0_i32 = arith.constant 0 : i32
    %c0_i32_0 = arith.constant 0 : i32
    return %c0_i32, %arg0 : i32, i32
  }
}

</mosaic_0001>

<llo_original>
// kernel: tpu_custom_call.1
$region0: #{tpu_custom_call.1}
  #allocation0 [shape = 'u32[]', space=smem, size = 0x4, offset = 0x4, fixed_abs, tag = 'smem constant byte address 0x4 - core index']
  #allocation1 [shape = 'u32[72,128]{1,0:T(1,128)}', space=vmem, size = 0x9000, scoped, tag = 'internal scratch']
  %s0 = inlined_call_operand.hbm [shape: f32[1,32], index: 0, kind: input, shape index: {}]
  %s1 = inlined_call_operand.hbm [shape: f32[32,128], index: 1, kind: input, shape index: {}]
  %s2 = inlined_call_operand.vmem [shape: f32[1,128], index: 2, kind: input, shape index: {}]
  %s3 = inlined_call_operand.hbm [shape: f32[128,128], index: 3, kind: input, shape index: {}]
  %s4 = inlined_call_operand.vmem [shape: f32[1,128], index: 4, kind: input, shape index: {}]
  %s5 = inlined_call_operand.hbm [shape: f32[1,128], index: 5, kind: output, shape index: {}]
  %s6 = sld [smem:[#allocation0]]
  $region42: #{tpu_custom_call.1} parent=0
    _
  %s8 = ssub.s32 1, %s6
  %s9 = scalar_select 0, %s8, %s6
  $region1: #{tpu_custom_call.1} parent=0
    #allocation2 [shape = 'u8[512]{0}', space=vmem, size = 0x400, scoped, tag = 'input window, operand 0, single buffered']
    #allocation3 [shape = 's32[1]{0}', space=sflag, size = 0x4, scoped, tag = 'scoped memory for tpu_custom_call.1']
    #allocation4 [shape = 's32[1]{0}', space=sflag, size = 0x4, scoped, tag = 'scoped memory for tpu_custom_call.1']
    #allocation5 [shape = 'u8[16384]{0}', space=vmem, size = 0x4000, scoped, tag = 'input window, operand 1, single buffered']
    #allocation6 [shape = 's32[1]{0}', space=sflag, size = 0x4, scoped, tag = 'scoped memory for tpu_custom_call.1']
    #allocation7 [shape = 'u8[65536]{0}', space=vmem, size = 0x10000, scoped, tag = 'input window, operand 3, single buffered']
    #allocation8 [shape = 'u8[512]{0}', space=vmem, size = 0x400, scoped, tag = 'output window, operand 0, single buffered']
    %10 = vsyncpa [#allocation3], 0
    %11 = vsyncpa [#allocation6], 0
    %12 = vsyncpa [#allocation4], 0
    // Predicated region
    $region2: #{tpu_custom_call.1} parent=1 // pred_check
      _
    $region3: #{tpu_custom_call.1} parent=1 // pred_check_branch
      %14 = sbr.rel (0) target = $region5
    $region4: #{tpu_custom_call.1} parent=1 // pred_region
      %16 = vsyncadd [#allocation3], 0
      %s18 = sshll.u32 %s0, 4
      %s19 = int_to_ptr.hbm [resolvable:$true] %s18
      %s20 = sshll.u32 [#allocation2], 4
      %s21 = int_to_ptr.vmem [resolvable:$true] %s20
      %23 = dma.hbm_to_vmem [thread:$0]  %s19, 16, %s21, [#allocation3]
    $region5: #{tpu_custom_call.1} parent=1 // pred_fallthru
      _
    // Predicated region
    $region6: #{tpu_custom_call.1} parent=1 // pred_check
      _
    $region7: #{tpu_custom_call.1} parent=1 // pred_check_branch
      %25 = sbr.rel (0) target = $region9
    $region8: #{tpu_custom_call.1} parent=1 // pred_region
      %27 = vsyncadd [#allocation6], 0
      %s28 = sshll.u32 %s1, 4
      %s29 = int_to_ptr.hbm [resolvable:$true] %s28
      %s30 = sshll.u32 [#allocation5], 4
      %s31 = int_to_ptr.vmem [resolvable:$true] %s30
      %36 = dma.hbm_to_vmem [thread:$0]  %s29, 512, %s31, [#allocation6], 128, 128, 8
    $region9: #{tpu_custom_call.1} parent=1 // pred_fallthru
      _
    // Predicated region
    $region10: #{tpu_custom_call.1} parent=1 // pred_check
      _
    $region11: #{tpu_custom_call.1} parent=1 // pred_check_branch
      %38 = sbr.rel (0) target = $region13
    $region12: #{tpu_custom_call.1} parent=1 // pred_region
      _
    $region13: #{tpu_custom_call.1} parent=1 // pred_fallthru
      _
    // Predicated region
    $region14: #{tpu_custom_call.1} parent=1 // pred_check
      _
    $region15: #{tpu_custom_call.1} parent=1 // pred_check_branch
      %40 = sbr.rel (0) target = $region17
    $region16: #{tpu_custom_call.1} parent=1 // pred_region
      %42 = vsyncadd [#allocation6], 0
      %s43 = sshll.u32 %s3, 4
      %s44 = int_to_ptr.hbm [resolvable:$true] %s43
      %s45 = sshll.u32 [#allocation7], 4
      %s46 = int_to_ptr.vmem [resolvable:$true] %s45
      %51 = dma.hbm_to_vmem [thread:$0]  %s44, 2048, %s46, [#allocation6], 128, 128, 8
    $region17: #{tpu_custom_call.1} parent=1 // pred_fallthru
      _
    // Predicated region
    $region18: #{tpu_custom_call.1} parent=1 // pred_check
      _
    $region19: #{tpu_custom_call.1} parent=1 // pred_check_branch
      %53 = sbr.rel (0) target = $region21
    $region20: #{tpu_custom_call.1} parent=1 // pred_region
      _
    $region21: #{tpu_custom_call.1} parent=1 // pred_fallthru
      _
    // Predicated region
    $region22: #{tpu_custom_call.1} parent=1 // pred_check
      _
    $region23: #{tpu_custom_call.1} parent=1 // pred_check_branch
      %55 = sbr.rel (0) target = $region25
    $region24: #{tpu_custom_call.1} parent=1 // pred_region
      %57 = dma.done [#allocation3], 16
    $region25: #{tpu_custom_call.1} parent=1 // pred_fallthru
      _
    // Predicated region
    $region26: #{tpu_custom_call.1} parent=1 // pred_check
      _
    $region27: #{tpu_custom_call.1} parent=1 // pred_check_branch
      %59 = sbr.rel (0) target = $region29
    $region28: #{tpu_custom_call.1} parent=1 // pred_region
      %61 = dma.done [#allocation6], 512
    $region29: #{tpu_custom_call.1} parent=1 // pred_fallthru
      _
    // Predicated region
    $region30: #{tpu_custom_call.1} parent=1 // pred_check
      _
    $region31: #{tpu_custom_call.1} parent=1 // pred_check_branch
      %63 = sbr.rel (0) target = $region33
    $region32: #{tpu_custom_call.1} parent=1 // pred_region
      %65 = dma.done [#allocation6], 2048
    $region33: #{tpu_custom_call.1} parent=1 // pred_fallthru
      _
    %v66 = vld [vmem:[#allocation2] sm:$0x1]
    %v67 = vld [vmem:[#allocation5] sm:$0xff]
    %v68 = vld [vmem:[#allocation5 + $0x8] sm:$0xff]
    %v69 = vld [vmem:[#allocation5 + $0x10] sm:$0xff]
    %v70 = vld [vmem:[#allocation5 + $0x18] sm:$0xff]
    %v71 = vld [vmem:[%s2] sm:$0x1]
    %vm72 = vcmask 261120
    %v74 = vsel %vm72, %v66, 0
    %76 = vmatpush.msra.mxu0 0.0
    %77 = vmatpush.msra.mxu0 0.0
    %78 = vmatpush.msra.mxu0 0.0
    %79 = vmatpush.msra.mxu0 0.0
    %80 = vmatpush.msra.mxu0 0.0
    %81 = vmatpush.msra.mxu0 0.0
    %82 = vmatpush.msra.mxu0 0.0
    %83 = vmatpush.msra.mxu0 0.0
    %84 = vmatpush.msra.mxu0 0.0
    %85 = vmatpush.msra.mxu0 0.0
    %86 = vmatpush.msra.mxu0 0.0
    %87 = vmatpush.msra.mxu0 0.0
    %88 = vmatpush.msra.mxu0 %v70
    %89 = vmatpush.msra.mxu0 %v69
    %90 = vmatpush.msra.mxu0 %v68
    %91 = vmatpush.msra.mxu0 %v67
    %92 = vmatmul.f32.gmra.mxu0 %v74
    %v93 = vpop.f32.mrf.mxu0
    %v94 = vadd.f32 %v71, %v93
    %95 = vdwg.mxu0
    %v96 = vxor.u32 %v94, 2147483648
    %v97 = vmul.f32 %v96, 1.442695
    %v98 = vpow.pop %v97
    %v99 = vadd.f32 %v98, 1.0
    %v100 = vrcp.pop %v99
    %v101 = vmul.f32 %v99, %v100
    %v102 = vsub.f32 1.0, %v101
    %v103 = vmul.f32 %v100, %v102
    %v104 = vadd.f32 %v100, %v103
    %vm105 = vweird.f32 %v99
    %vm106 = vweird.f32 %v100
    %vm107 = vmor %vm105, %vm106
    %v108 = vsel %vm107, %v100, %v104
    %v109 = vand.u32 2147483647, %v99
    %vm110 = vcmp.eq.f32.partialorder %v109, 8.507059e+37
    %v111 = vand.u32 %v99, 2147483648
    %v112 = vor.u32 1.1754944e-38, %v111
    %v113 = vsel %vm110, %v112, %v108
    %v114 = vmul.f32 1.0, %v113
    %v115 = vmul.f32 %v94, %v114
    %v116 = vld [vmem:[#allocation7] sm:$0xff]
    %v117 = vld [vmem:[#allocation7 + $0x8] sm:$0xff]
    %v118 = vld [vmem:[#allocation7 + $0x10] sm:$0xff]
    %v119 = vld [vmem:[#allocation7 + $0x18] sm:$0xff]
    %v120 = vld [vmem:[#allocation7 + $0x20] sm:$0xff]
    %v121 = vld [vmem:[#allocation7 + $0x28] sm:$0xff]
    %v122 = vld [vmem:[#allocation7 + $0x30] sm:$0xff]
    %v123 = vld [vmem:[#allocation7 + $0x38] sm:$0xff]
    %v124 = vld [vmem:[#allocation7 + $0x40] sm:$0xff]
    %v125 = vld [vmem:[#allocation7 + $0x48] sm:$0xff]
    %v126 = vld [vmem:[#allocation7 + $0x50] sm:$0xff]
    %v127 = vld [vmem:[#allocation7 + $0x58] sm:$0xff]
    %v128 = vld [vmem:[#allocation7 + $0x60] sm:$0xff]
    %v129 = vld [vmem:[#allocation7 + $0x68] sm:$0xff]
    %v130 = vld [vmem:[#allocation7 + $0x70] sm:$0xff]
    %v131 = vld [vmem:[#allocation7 + $0x78] sm:$0xff]
    %v132 = vld [vmem:[%s4] sm:$0x1]
    %133 = vmatpush.msra.mxu0 %v131
    %134 = vmatpush.msra.mxu0 %v130
    %135 = vmatpush.msra.mxu0 %v129
    %136 = vmatpush.msra.mxu0 %v128
    %137 = vmatpush.msra.mxu0 %v127
    %138 = vmatpush.msra.mxu0 %v126
    %139 = vmatpush.msra.mxu0 %v125
    %140 = vmatpush.msra.mxu0 %v124
    %141 = vmatpush.msra.mxu0 %v123
    %142 = vmatpush.msra.mxu0 %v122
    %143 = vmatpush.msra.mxu0 %v121
    %144 = vmatpush.msra.mxu0 %v120
    %145 = vmatpush.msra.mxu0 %v119
    %146 = vmatpush.msra.mxu0 %v118
    %147 = vmatpush.msra.mxu0 %v117
    %148 = vmatpush.msra.mxu0 %v116
    %149 = vmatmul.f32.gmra.mxu0 %v115
    %v150 = vpop.f32.mrf.mxu0
    %v151 = vadd.f32 %v132, %v150
    %152 = vdwg.mxu0
    %153 = vst [vmem:[#allocation8] sm:$0x1] %v151
    // Predicated region
    $region34: #{tpu_custom_call.1} parent=1 // pred_check
      _
    $region35: #{tpu_custom_call.1} parent=1 // pred_check_branch
      %155 = sbr.rel (0) target = $region37
    $region36: #{tpu_custom_call.1} parent=1 // pred_region
      %157 = vsyncadd [#allocation4], 0
      %s159 = sshll.u32 [#allocation8], 4
      %s160 = int_to_ptr.vmem [resolvable:$true] %s159
      %s161 = sshll.u32 %s5, 4
      %s162 = int_to_ptr.hbm [resolvable:$true] %s161
      %164 = dma.vmem_to_hbm [thread:$0]  %s160, 16, %s162, [#allocation4]
    $region37: #{tpu_custom_call.1} parent=1 // pred_fallthru
      _
    // Predicated region
    $region38: #{tpu_custom_call.1} parent=1 // pred_check
      _
    $region39: #{tpu_custom_call.1} parent=1 // pred_check_branch
      %166 = sbr.rel (0) target = $region41
    $region40: #{tpu_custom_call.1} parent=1 // pred_region
      %168 = dma.done [#allocation4], 16
    $region41: #{tpu_custom_call.1} parent=1 // pred_fallthru
      _
    %169 = vsyncpa [#allocation3], 1
    %170 = vsyncpa [#allocation6], 1
    %171 = vsyncpa [#allocation4], 1

</llo_original>
